<compile_context>
chip_gen: v6e
topology: v6e:2x2x1
jax: 0.10.0
libtpu: 0.0.40
codegen_flags: <defaults>
</compile_context>

<pallas_src>
import functools

import jax
import jax.numpy as jnp
from jax.experimental import pallas as pl
from jax.experimental.pallas import tpu as pltpu


_LANES = 128
_SUBLANES = 8


def _round_up(a, m):
    return (a + m - 1) // m * m


def _tpu_vmem_and_cores():
    """Best-effort hardware query; conservative (v7x-like) fallback."""
    vmem_bytes = 64 * 1024 * 1024          # v7x per-TensorCore physical VMEM
    num_cores = 2                          # assume 2 TCs may share the grid
    try:
        info = pltpu.get_tpu_info()
        vmem_bytes = int(getattr(info, "vmem_capacity_bytes", vmem_bytes))
        for attr in ("num_cores", "core_count", "tensorcore_count"):
            val = getattr(info, attr, None)
            if val:
                num_cores = int(val)
                break
    except Exception:
        pass
    return vmem_bytes, num_cores


def _vmem_limit_bytes(vmem_bytes):
    # ~3/4 of physical VMEM: ~96 MiB on v5e/v6e (128 MiB), 48 MiB on v7x.
    return max(32 * 1024 * 1024, min((vmem_bytes * 3) // 4, 96 * 1024 * 1024))


# ---------------------------------------------------------------------------
# kernel_size == 2 (pad = stride = 1): the canonical darknet "stride 1" pool.
# NCHW-native: no layout passes; block = (rows, H, W) over flattened N*C.
# ---------------------------------------------------------------------------
def _maxpool_k2_kernel(x_ref, o_ref):
    """out[i,j] = max of the 2x2 window at (i,j) with right/bottom replicate.

    Block layout (rows, H, W): W on lanes, H on sublanes, rows leading. The
    two window shifts are a lane slice and a sublane slice of the loaded
    block plus an edge-replicated last column/row.
    """
    x = x_ref[...]                                      # (rows, H, W)
    _, H, W = x.shape
    m = x
    if W > 1:
        right = jnp.concatenate([x[:, :, 1:], x[:, :, W - 1:]], axis=2)
        m = jnp.maximum(m, right)
    if H > 1:
        below = jnp.concatenate([m[:, 1:, :], m[:, H - 1:, :]], axis=1)
        m = jnp.maximum(m, below)
    o_ref[...] = m


def _pool_k2(x):
    N, C, H, W = x.shape
    NC = N * C
    xf = x.reshape(NC, H, W)            # free: NCHW is contiguous over (H, W)
    itemsize = jnp.dtype(x.dtype).itemsize
    vmem_bytes, cores = _tpu_vmem_and_cores()
    vmem_limit = _vmem_limit_bytes(vmem_bytes)

    # Padded VMEM bytes of one (1, H, W) plane (sublane=H, lane=W tiling).
    plane = _round_up(H, _SUBLANES) * _round_up(W, _LANES) * itemsize
    # 2x double-buffered input + output blocks plus ~3 plane-sized temporaries.
    per_row = 2 * (plane + plane) + 3 * plane
    budget = int(vmem_limit * 0.7)
    rb = max(1, min(NC, budget // per_row))
    min_steps = 2 * max(1, cores)       # keep both TCs / the pipeline busy
    if NC >= min_steps:
        rb = min(rb, max(1, NC // min_steps))
    grid = (pl.cdiv(NC, rb),)

    out = pl.pallas_call(
        _maxpool_k2_kernel,
        out_shape=jax.ShapeDtypeStruct((NC, H, W), x.dtype),
        grid=grid,
        in_specs=[pl.BlockSpec((rb, H, W), lambda i: (i, 0, 0))],
        out_specs=pl.BlockSpec((rb, H, W), lambda i: (i, 0, 0)),
        compiler_params=pltpu.CompilerParams(
            dimension_semantics=("parallel",),
            vmem_limit_bytes=vmem_limit,
        ),
    )(xf)
    return out.reshape(N, C, H, W)


# ---------------------------------------------------------------------------
# General kernel_size >= 3 (stride s = k - 1): channels-last blocks so the
# channel axis is lane-dense; strided window selection via static reshapes.
# ---------------------------------------------------------------------------
def _maxpool_general_kernel(x_ref, o_ref, *, k, s, Ho, Wo):
    x = x_ref[...][0]                                   # (H, W, Cb)
    H, W, Cb = x.shape

    # ---- columns (W / sublane axis): replicate-extend once, then group ----
    We = (Wo + 1) * s                                   # covers col Wo*s
    last_col = x[:, W - 1:W, :]
    xe = jnp.concatenate([x] + [last_col] * (We - W), axis=1)   # (H, We, Cb)
    xg = xe.reshape(H, Wo + 1, s, Cb)

    def col_slab(dj):                                   # cols dj + j*s, j<Wo
        q, r = divmod(dj, s)                            # q in {0, 1}
        return xg[:, q:q + Wo, r, :]                    # (H, Wo, Cb)

    wmax = col_slab(0)
    for dj in range(1, k):
        wmax = jnp.maximum(wmax, col_slab(dj))

    # ---- rows (H / leading axis): leading-dim reshape, free relayout -------
    He = (Ho + 1) * s
    last_row = wmax[H - 1:H]
    wext = jnp.concatenate([wmax] + [last_row] * (He - H), axis=0)
    wg = wext.reshape(Ho + 1, s, Wo, Cb)                # last two dims intact

    def row_slab(di):                                   # rows di + i*s, i<Ho
        q, r = divmod(di, s)
        return wg[q:q + Ho, r]                          # (Ho, Wo, Cb)

    out = row_slab(0)
    for di in range(1, k):
        out = jnp.maximum(out, row_slab(di))

    o_ref[...] = out[None]


def _pick_cb_general(N, C, H, W, Ho, Wo, itemsize, vmem_limit, cores, s):
    if C % _LANES != 0:
        # TODO(synk): for small / non-128-multiple C, pad channels up to 128
        # (fused into the NHWC relayout) so stores stay lane-dense.
        return C
    budget = int(vmem_limit * 0.7)
    We = (Wo + 1) * s

    def vmem_for(cb):
        inb = H * _round_up(W, _SUBLANES) * cb * itemsize
        outb = Ho * _round_up(Wo, _SUBLANES) * cb * itemsize
        tmp = (H * _round_up(We, _SUBLANES)
               + (Ho + 1) * s * _round_up(Wo, _SUBLANES)) * cb * itemsize
        # double-buffered in/out blocks + extended col/row temporaries
        return 2 * (inb + outb) + tmp + inb

    cands = [cb for cb in range(_LANES, C + 1, _LANES) if C % cb == 0]
    fitting = [cb for cb in cands if vmem_for(cb) <= budget] or [_LANES]
    min_steps = 2 * max(1, cores)
    enough = [cb for cb in fitting if N * (C // cb) >= min_steps]
    return max(enough) if enough else max(fitting)


def _pool_general(x, k, s):
    N, C, H, W = x.shape
    Ho = (H - 1) // s + 1
    Wo = (W - 1) // s + 1
    itemsize = jnp.dtype(x.dtype).itemsize
    vmem_bytes, cores = _tpu_vmem_and_cores()
    vmem_limit = _vmem_limit_bytes(vmem_bytes)

    # TODO(synk): if the surrounding model runs NHWC end-to-end, these two
    # relayout passes (one HBM read+write each) disappear entirely.
    x_nhwc = jnp.transpose(x, (0, 2, 3, 1))             # (N, H, W, C)

    cb = _pick_cb_general(N, C, H, W, Ho, Wo, itemsize, vmem_limit, cores, s)
    grid = (N, C // cb)
    kernel = functools.partial(_maxpool_general_kernel, k=k, s=s, Ho=Ho, Wo=Wo)
    out_nhwc = pl.pallas_call(
        kernel,
        out_shape=jax.ShapeDtypeStruct((N, Ho, Wo, C), x.dtype),
        grid=grid,
        in_specs=[pl.BlockSpec((1, H, W, cb), lambda n, c: (n, 0, 0, c))],
        out_specs=pl.BlockSpec((1, Ho, Wo, cb), lambda n, c: (n, 0, 0, c)),
        compiler_params=pltpu.CompilerParams(
            dimension_semantics=("parallel", "parallel"),
            vmem_limit_bytes=vmem_limit,
        ),
    )(x_nhwc)
    return jnp.transpose(out_nhwc, (0, 3, 1, 2))        # back to NCHW


def max_pool_stride1(x, kernel_size):
    """Pallas equivalent of darknet MaxPoolStride1.forward. x: (N, C, H, W)."""
    k = int(kernel_size)
    if k <= 1:
        # kernel_size=1 => pad=0 (PyTorch would reject stride=0); 1x1 pool = id.
        return x
    s = k - 1
    if s == 1:                           # canonical darknet case (k == 2)
        return _pool_k2(x)
    return _pool_general(x, k, s)


def _reference(x, kernel_size):
    """Pure-JAX reference matching the PyTorch forward."""
    k = int(kernel_size)
    if k <= 1:
        return x
    s = k - 1
    xp = jnp.pad(x, ((0, 0), (0, 0), (0, s), (0, s)), mode="edge")
    return jax.lax.reduce_window(
        xp, -jnp.inf, jax.lax.max,
        window_dimensions=(1, 1, k, k),
        window_strides=(1, 1, s, s),
        padding="VALID",
    )


if __name__ == "__main__":
    key = jax.random.PRNGKey(0)
    k1, k2 = jax.random.split(key)

    # Canonical darknet usage: kernel_size=2 -> pad=1, stride=1 (NCHW-native).
    x = jax.random.normal(k1, (2, 4, 16, 16), dtype=jnp.float32)
    out = max_pool_stride1(x, kernel_size=2)
    jax.block_until_ready(out)
    ref = _reference(x, 2)
    assert out.shape == ref.shape == (2, 4, 16, 16), (out.shape, ref.shape)
    assert jnp.allclose(out, ref), "Pallas output mismatch vs reference (k=2)"

    # General path: k=3 (stride 2), lane-dense channels, clamped tails.
    x3 = jax.random.normal(k2, (1, 128, 15, 15), dtype=jnp.float32)
    out3 = max_pool_stride1(x3, kernel_size=3)
    jax.block_until_ready(out3)
    ref3 = _reference(x3, 3)
    assert out3.shape == ref3.shape == (1, 128, 8, 8), (out3.shape, ref3.shape)
    assert jnp.allclose(out3, ref3), "Pallas output mismatch vs reference (k=3)"

    print("KERNEL_OK")
</pallas_src>

<mosaic_0001>
module attributes {stable_mosaic.version = 11 : i64} {
  func.func @_maxpool_k2_kernel(%arg0: i32, %arg1: memref<2x16x16xf32, #tpu.memory_space<vmem>>, %arg2: memref<2x16x16xf32, #tpu.memory_space<vmem>>) attributes {dimension_semantics = [#tpu.dimension_semantics<parallel>], iteration_bounds = array<i64: 4>, scalar_prefetch = 0 : i64, scratch_operands = 0 : i64, tpu.core_type = #tpu.core_type<tc>, window_params = [{transform_indices = @transform_0, window_bounds = array<i64: 2, 16, 16>}, {transform_indices = @transform_1, window_bounds = array<i64: 2, 16, 16>}]} {
    %c0 = arith.constant 0 : index
    %c0_0 = arith.constant 0 : index
    %c0_1 = arith.constant 0 : index
    %0 = vector.load %arg1[%c0, %c0_0, %c0_1] : memref<2x16x16xf32, #tpu.memory_space<vmem>>, vector<2x16x16xf32>
    %1 = vector.extract_strided_slice %0 {offsets = [0, 0, 1], sizes = [2, 16, 15], strides = [1, 1, 1]} : vector<2x16x16xf32> to vector<2x16x15xf32>
    %2 = vector.extract_strided_slice %0 {offsets = [0, 0, 15], sizes = [2, 16, 1], strides = [1, 1, 1]} : vector<2x16x16xf32> to vector<2x16x1xf32>
    %3 = tpu.concatenate %1, %2 in 2 : vector<2x16x15xf32>, vector<2x16x1xf32> -> vector<2x16x16xf32>
    %4 = arith.maximumf %0, %3 : vector<2x16x16xf32>
    %5 = vector.extract_strided_slice %4 {offsets = [0, 1, 0], sizes = [2, 15, 16], strides = [1, 1, 1]} : vector<2x16x16xf32> to vector<2x15x16xf32>
    %6 = vector.extract_strided_slice %4 {offsets = [0, 15, 0], sizes = [2, 1, 16], strides = [1, 1, 1]} : vector<2x16x16xf32> to vector<2x1x16xf32>
    %7 = tpu.concatenate %5, %6 in 1 : vector<2x15x16xf32>, vector<2x1x16xf32> -> vector<2x16x16xf32>
    %8 = arith.maximumf %4, %7 : vector<2x16x16xf32>
    %c0_2 = arith.constant 0 : index
    %c0_3 = arith.constant 0 : index
    %c0_4 = arith.constant 0 : index
    %9 = vector.load %arg2[%c0_2, %c0_3, %c0_4] : memref<2x16x16xf32, #tpu.memory_space<vmem>>, vector<2x16x16xf32>
    tpu.vector_store %arg2[%c0_2, %c0_3, %c0_4], %8 {strides = array<i32>} : memref<2x16x16xf32, #tpu.memory_space<vmem>>, vector<2x16x16xf32>,
    return
  }
  func.func @transform_0(%arg0: i32) -> (i32, i32, i32) {
    %c0_i32 = arith.constant 0 : i32
    %c0_i32_0 = arith.constant 0 : i32
    %c0_i32_1 = arith.constant 0 : i32
    return %arg0, %c0_i32, %c0_i32_0 : i32, i32, i32
  }
  func.func @transform_1(%arg0: i32) -> (i32, i32, i32) {
    %c0_i32 = arith.constant 0 : i32
    %c0_i32_0 = arith.constant 0 : i32
    %c0_i32_1 = arith.constant 0 : i32
    return %arg0, %c0_i32, %c0_i32_0 : i32, i32, i32
  }
}

</mosaic_0001>

<llo_original>
// kernel: tpu_custom_call.1
$region0: #{tpu_custom_call.1}
  #allocation0 [shape = 'u32[]', space=smem, size = 0x4, offset = 0x4, fixed_abs, tag = 'smem constant byte address 0x4 - core index']
  #allocation1 [shape = 'u32[144,128]{1,0:T(1,128)}', space=vmem, size = 0x12000, scoped, tag = 'internal scratch']
  %s0 = inlined_call_operand.hbm [shape: f32[8,16,16], index: 0, kind: input, shape index: {}]
  %s1 = inlined_call_operand.hbm [shape: f32[8,16,16], index: 1, kind: output, shape index: {}]
  %s2 = sld [smem:[#allocation0]]
  $region41: #{tpu_custom_call.1} parent=0
    _
  %s4 = ssub.s32 1, %s2
  %s5 = scalar_select 0, %s4, %s2
  $region1: #{tpu_custom_call.1} parent=0
    #allocation2 [shape = 'u8[32768]{0}', space=vmem, size = 0x8000, scoped, tag = 'input window, operand 0']
    #allocation3 [shape = 's32[2]{0}', space=sflag, size = 0x8, scoped, tag = 'scoped memory for tpu_custom_call.1']
    #allocation4 [shape = 's32[2]{0}', space=sflag, size = 0x8, scoped, tag = 'scoped memory for tpu_custom_call.1']
    #allocation5 [shape = 'u8[32768]{0}', space=vmem, size = 0x8000, scoped, tag = 'output window, operand 0']
    %6 = vsyncpa [#allocation3], 0
    %s7 = scalar_lea.sflag [#allocation3], 1
    %8 = vsyncpa %s7, 0
    %9 = vsyncpa [#allocation4], 0
    %s10 = scalar_lea.sflag [#allocation4], 1
    %11 = vsyncpa %s10, 0
    loop: start=0, step=1, limit=6
    $region2: #{tpu_custom_call.1} parent=1 // loop_pre_header
      _
    $region3: #{tpu_custom_call.1} parent=1 // loop_header
      %s13 = sphi 0, %s17
      %p14 = scmp.ge.s32.totalorder %s13, 6
      %s23 = sphi 0, %s25
      %s26 = sphi 0, %s23
      %s27 = sphi 0, %s26
      %s43 = sphi 0, %s27
      %s49 = sphi 0, %s51
      %s52 = sphi 0, %s49
      %s53 = sphi 0, %s52
      %s69 = sphi 0, %s53
    $region4: #{tpu_custom_call.1} parent=1 // loop_header_branch
      %16 = sbr.rel (%p14) target = $region8
    $region5: #{tpu_custom_call.1} parent=1 // loop_body
      %s18 = ssub.s32 %s13, 1
      %s19 = ssub.s32 %s13, 2
      %s20 = sadd.s32 %s13, 1
      %s21 = ssub.s32 %s13, %s20
      %p22 = scmp.eq.s32.totalorder %s21, 0
      %s24 = sadd.s32 %s23, 1
      %s25 = scalar_select %p22, %s23, %s24
      %p28 = pneg %p22
      %p29 = scmp.eq.s32.totalorder %s13, 3
      %p30 = por %p28, %p29
      %p31 = scmp.ne.s32.totalorder %s23, %s26
      %p32 = scmp.eq.s32.totalorder %s13, 0
      %p33 = por %p31, %p32
      %p34 = scmp.ne.s32.totalorder %s23, %s26
      %p35 = scmp.eq.s32.totalorder %s18, 3
      %p36 = por %p34, %p35
      %p37 = scmp.ne.s32.totalorder %s26, %s27
      %p38 = scmp.eq.s32.totalorder %s18, 0
      %p39 = por %p37, %p38
      %p40 = scmp.ne.s32.totalorder %s26, %s27
      %p41 = scmp.eq.s32.totalorder %s19, 3
      %p42 = por %p40, %p41
      %p44 = scmp.ne.s32.totalorder %s27, %s43
      %p45 = scmp.eq.s32.totalorder %s19, 0
      %p46 = por %p44, %p45
      %s47 = ssub.s32 %s13, %s20
      %p48 = scmp.eq.s32.totalorder %s47, 0
      %s50 = sadd.s32 %s49, 1
      %s51 = scalar_select %p48, %s49, %s50
      %p54 = pneg %p48
      %p55 = scmp.eq.s32.totalorder %s13, 3
      %p56 = por %p54, %p55
      %p57 = scmp.ne.s32.totalorder %s49, %s52
      %p58 = scmp.eq.s32.totalorder %s13, 0
      %p59 = por %p57, %p58
      %p60 = scmp.ne.s32.totalorder %s49, %s52
      %p61 = scmp.eq.s32.totalorder %s18, 3
      %p62 = por %p60, %p61
      %p63 = scmp.ne.s32.totalorder %s52, %s53
      %p64 = scmp.eq.s32.totalorder %s18, 0
      %p65 = por %p63, %p64
      %p66 = scmp.ne.s32.totalorder %s52, %s53
      %p67 = scmp.eq.s32.totalorder %s19, 3
      %p68 = por %p66, %p67
      %p70 = scmp.ne.s32.totalorder %s53, %s69
      %p71 = scmp.eq.s32.totalorder %s19, 0
      %p72 = por %p70, %p71
      %p73 = scmp.le.s32.totalorder 1, %s13
      %p74 = scmp.lt.s32.totalorder %s13, 5
      %p75 = pnand %p73, %p74
      %p76 = pneg %p75
      // Predicated region
      $region9: #{tpu_custom_call.1} parent=5 // pred_check
        _
      $region10: #{tpu_custom_call.1} parent=5 // pred_check_branch
        %78 = sbr.rel (%p75) target = $region12
      $region11: #{tpu_custom_call.1} parent=5 // pred_region
        %s79 = ssub.s32 %s13, 1
      $region12: #{tpu_custom_call.1} parent=5 // pred_fallthru
        _
      %p80 = scmp.lt.s32.totalorder %s13, 4
      // Predicated region
      $region13: #{tpu_custom_call.1} parent=5 // pred_check
        %p81 = pneg %p80
      $region14: #{tpu_custom_call.1} parent=5 // pred_check_branch
        %83 = sbr.rel (%p81) target = $region16
      $region15: #{tpu_custom_call.1} parent=5 // pred_region
        // Predicated region
        $region17: #{tpu_custom_call.1} parent=15 // pred_check
          %p84 = pneg %p33
        $region18: #{tpu_custom_call.1} parent=15 // pred_check_branch
          %86 = sbr.rel (%p84) target = $region20
        $region19: #{tpu_custom_call.1} parent=15 // pred_region
          %s87 = sand.u32 %s23, 1
          %s88 = scalar_lea.sflag [#allocation3], %s87
          %s89 = sand.u32 %s23, 1
          %s90 = smul.addr %s89, 32
          %s91 = scalar_lea.vmem [#allocation2], %s90
          %s92 = smul.u32 2, %s13
          %s94 = ssub.s32 512, 512
          %95 = vsyncadd %s88, %s94
          %s96 = smul.addr %s92, 2
          %s97 = smul.addr %s96, 128
          %s98 = scalar_lea.hbm %s0, %s97
          %s99 = sshll.u32 %s91, 4
          %s100 = int_to_ptr.vmem [resolvable:$true] %s99
          %105 = dma.hbm_to_vmem [thread:$0]  %s98, 512, %s100, %s88, 128, 128, 8
        $region20: #{tpu_custom_call.1} parent=15 // pred_fallthru
          _
      $region16: #{tpu_custom_call.1} parent=5 // pred_fallthru
        _
      %p106 = scmp.le.s32.totalorder 1, %s13
      %p107 = scmp.lt.s32.totalorder %s13, 5
      %p108 = pnand %p106, %p107
      %p109 = pneg %p108
      // Predicated region
      $region21: #{tpu_custom_call.1} parent=5 // pred_check
        _
      $region22: #{tpu_custom_call.1} parent=5 // pred_check_branch
        %111 = sbr.rel (%p108) target = $region24
      $region23: #{tpu_custom_call.1} parent=5 // pred_region
        %s112 = ssub.s32 %s13, 1
        %s113 = sand.u32 %s26, 1
        %s114 = scalar_lea.sflag [#allocation3], %s113
        %s115 = sand.u32 %s26, 1
        %s116 = smul.addr %s115, 32
        %s117 = scalar_lea.vmem [#allocation2], %s116
        // Predicated region
        $region25: #{tpu_custom_call.1} parent=23 // pred_check
          %p118 = pneg %p39
        $region26: #{tpu_custom_call.1} parent=23 // pred_check_branch
          %120 = sbr.rel (%p118) target = $region28
        $region27: #{tpu_custom_call.1} parent=23 // pred_region
          %121 = dma.done %s114, 512
        $region28: #{tpu_custom_call.1} parent=23 // pred_fallthru
          _
        %s122 = sand.u32 %s26, 1
        %s123 = scalar_lea.sflag [#allocation3], %s122
        %s124 = sand.u32 %s26, 1
        %s125 = smul.addr %s124, 32
        %s126 = scalar_lea.vmem [#allocation2], %s125
        %p127 = pneg %p39
        %p128 = pneg %p36
        %p129 = pneg %p65
        %p130 = pneg %p62
        %s131 = sand.u32 %s52, 1
        %s132 = scalar_lea.sflag [#allocation4], %s131
        %s133 = sand.u32 %s52, 1
        %s134 = smul.addr %s133, 32
        %s135 = scalar_lea.vmem [#allocation5], %s134
        %s136 = smul.u32 2, %s18
        %s137 = smul.u32 2, %s18
        %v138 = vld [vmem:[%s117] sm:$0xff]
        %v139 = vld [vmem:[%s117 + $0x8] sm:$0xff]
        %v140 = vld [vmem:[%s117 + $0x10] sm:$0xff]
        %v141 = vld [vmem:[%s117 + $0x18] sm:$0xff]
        %146 = vrot.lane.b32.xlu0 %v138, 127
        %v147 = vpop.permute.xlu0 %146
        %148 = vrot.lane.b32.xlu0 %v139, 127
        %v149 = vpop.permute.xlu0 %148
        %150 = vrot.lane.b32.xlu0 %v140, 127
        %v151 = vpop.permute.xlu0 %150
        %152 = vrot.lane.b32.xlu0 %v141, 127
        %v153 = vpop.permute.xlu0 %152
        %vm158 = vcmask 121856
        %v159 = vsel %vm158, %v147, %v138
        %v160 = vsel %vm158, %v149, %v139
        %v161 = vsel %vm158, %v151, %v140
        %v162 = vsel %vm158, %v153, %v141
        %v163 = vmax.f32 %v138, %v159
        %v164 = vmax.f32 %v139, %v160
        %v165 = vmax.f32 %v140, %v161
        %v166 = vmax.f32 %v141, %v162
        %vm171 = vcmask 1046528
        %v172 = vrot.slane %v163, 1
        %v173 = vrot.slane %v164, 1
        %v174 = vsel %vm171, %v172, %v173
        %v175 = vrot.slane %v165, 1
        %v176 = vrot.slane %v166, 1
        %v177 = vsel %vm171, %v175, %v176
        %v182 = vsel %vm171, %v173, %v164
        %v183 = vsel %vm171, %v176, %v166
        %v184 = vmax.f32 %v163, %v174
        %v185 = vmax.f32 %v164, %v182
        %v186 = vmax.f32 %v165, %v177
        %v187 = vmax.f32 %v166, %v183
        %vm188 = vcmask 130048
        %189 = vst.msk [vmem:[%s135] sm:$0xff] %vm188, %v184
        %190 = vst.msk [vmem:[%s135 + $0x8] sm:$0xff] %vm188, %v185
        %191 = vst.msk [vmem:[%s135 + $0x10] sm:$0xff] %vm188, %v186
        %192 = vst.msk [vmem:[%s135 + $0x18] sm:$0xff] %vm188, %v187
        %s193 = sand.u32 %s52, 1
        %s194 = scalar_lea.sflag [#allocation4], %s193
        %s195 = sand.u32 %s52, 1
        %s196 = smul.addr %s195, 32
        %s197 = scalar_lea.vmem [#allocation5], %s196
        // Predicated region
        $region29: #{tpu_custom_call.1} parent=23 // pred_check
          %p198 = pneg %p62
        $region30: #{tpu_custom_call.1} parent=23 // pred_check_branch
          %200 = sbr.rel (%p198) target = $region32
        $region31: #{tpu_custom_call.1} parent=23 // pred_region
          %s201 = smul.u32 2, %s18
          %s203 = ssub.s32 512, 512
          %204 = vsyncadd %s194, %s203
          %s205 = smul.addr %s201, 2
          %s206 = smul.addr %s205, 128
          %s207 = scalar_lea.hbm %s1, %s206
          %s208 = sshll.u32 %s197, 4
          %s209 = int_to_ptr.vmem [resolvable:$true] %s208
          %214 = dma.vmem_to_hbm [thread:$0]  %s209, 512, %s207, %s194, 128, 128, 8
        $region32: #{tpu_custom_call.1} parent=23 // pred_fallthru
          _
      $region24: #{tpu_custom_call.1} parent=5 // pred_fallthru
        _
      %p215 = scmp.le.s32.totalorder 2, %s13
      // Predicated region
      $region33: #{tpu_custom_call.1} parent=5 // pred_check
        %p216 = pneg %p215
      $region34: #{tpu_custom_call.1} parent=5 // pred_check_branch
        %218 = sbr.rel (%p216) target = $region36
      $region35: #{tpu_custom_call.1} parent=5 // pred_region
        %s219 = ssub.s32 %s13, 2
        // Predicated region
        $region37: #{tpu_custom_call.1} parent=35 // pred_check
          %p220 = pneg %p68
        $region38: #{tpu_custom_call.1} parent=35 // pred_check_branch
          %222 = sbr.rel (%p220) target = $region40
        $region39: #{tpu_custom_call.1} parent=35 // pred_region
          %s223 = sand.u32 %s53, 1
          %s224 = scalar_lea.sflag [#allocation4], %s223
          %s225 = sand.u32 %s53, 1
          %s226 = smul.addr %s225, 32
          %s227 = scalar_lea.vmem [#allocation5], %s226
          %228 = dma.done %s224, 512
        $region40: #{tpu_custom_call.1} parent=35 // pred_fallthru
          _
      $region36: #{tpu_custom_call.1} parent=5 // pred_fallthru
        _
    $region6: #{tpu_custom_call.1} parent=1 // loop_footer
      %s17 = sadd.s32 1, %s13
    $region7: #{tpu_custom_call.1} parent=1 // loop_footer_branch
      %12 = sbr.rel target = $region3
    $region8: #{tpu_custom_call.1} parent=1 // loop_exit
      _
    %229 = vsyncpa [#allocation3], 1
    %s230 = scalar_lea.sflag [#allocation3], 1
    %231 = vsyncpa %s230, 1
    %232 = vsyncpa [#allocation4], 1
    %s233 = scalar_lea.sflag [#allocation4], 1
    %234 = vsyncpa %s233, 1

</llo_original>
